<compile_context>
chip_gen: v5e
topology: v5e:2x2
jax: 0.10.0
libtpu: 0.0.40
codegen_flags: <defaults>
</compile_context>

<pallas_src>
import functools

import jax
import jax.numpy as jnp
from jax.experimental import pallas as pl
from jax.experimental.pallas import tpu as pltpu

_LANE = 128
_SUBLANE_ALIGN = 16  # row alignment valid for both f32 (8) and bf16 (16) tiles


def _mse_kernel(p_ref, l_ref, o_ref, acc_ref, *, total_elems, tile_rows, needs_mask):
    c = pl.program_id(0)  # core-split axis ("parallel")
    i = pl.program_id(1)  # streaming/reduction axis ("arbitrary")

    @pl.when(i == 0)
    def _():
        acc_ref[...] = jnp.zeros_like(acc_ref)

    d = p_ref[...].astype(jnp.float32) - l_ref[...].astype(jnp.float32)
    sq = d * d

    if needs_mask:
        # Mask elements past the true element count: handles the partial
        # trailing tile and the clamped duplicate tile on the core axis.
        row_off = (c * pl.num_programs(1) + i) * tile_rows
        row_ids = jax.lax.broadcasted_iota(jnp.int32, sq.shape, 0) + row_off
        col_ids = jax.lax.broadcasted_iota(jnp.int32, sq.shape, 1)
        full_rows = total_elems // _LANE
        rem = total_elems % _LANE
        mask = (row_ids < full_rows) | ((row_ids == full_rows) & (col_ids < rem))
        sq = jnp.where(mask, sq, 0.0)

    # Per-lane / per-sublane partial sums (VPU adds only); defer the expensive
    # cross-lane reduction to the wrapper (tiny array).
    acc_ref[...] += sq.reshape(-1, 8, _LANE).sum(axis=0)

    @pl.when(i == pl.num_programs(1) - 1)
    def _():
        o_ref[...] = acc_ref[...].reshape(1, 8, _LANE)


def mse_loss_pallas(pred, label, *, tile_rows=2048, num_cores=2):
    """Mean squared error over all elements, computed in a Pallas TPU kernel."""
    assert pred.shape == label.shape
    n = int(pred.size)
    lane = _LANE

    # Stream the original dtype (kernel casts per-tile to f32) — no upcast copy.
    flat_p = pred.reshape(-1)
    flat_l = label.reshape(-1)

    # Pad only the (at most one) partial 16x128 row-group; lane-divisible
    # inputs (the hot path) take no extra HBM pass.  Pad values are masked
    # in-kernel, so their contents are irrelevant.
    chunk = _SUBLANE_ALIGN * lane
    padded = ((n + chunk - 1) // chunk) * chunk
    if padded != n:
        flat_p = jnp.pad(flat_p, (0, padded - n))
        flat_l = jnp.pad(flat_l, (0, padded - n))
    rows = padded // lane
    p2 = flat_p.reshape(rows, lane)
    l2 = flat_l.reshape(rows, lane)

    tile_rows = max(_SUBLANE_ALIGN, (tile_rows // _SUBLANE_ALIGN) * _SUBLANE_ALIGN)
    tile_rows = min(tile_rows, rows)
    num_tiles = pl.cdiv(rows, tile_rows)
    inner = pl.cdiv(num_tiles, num_cores)
    coverage = num_cores * inner * tile_rows * lane
    needs_mask = coverage != n

    def in_map(c, i):
        # Clamp so any redundant tile (odd tile count / tiny input) re-reads
        # the last valid block; its contribution is masked to zero in-kernel.
        return (jnp.minimum(c * inner + i, num_tiles - 1), 0)

    kernel = functools.partial(
        _mse_kernel, total_elems=n, tile_rows=tile_rows, needs_mask=needs_mask)

    out = pl.pallas_call(
        kernel,
        out_shape=jax.ShapeDtypeStruct((num_cores, 8, lane), jnp.float32),
        grid_spec=pltpu.PrefetchScalarGridSpec(
            num_scalar_prefetch=0,
            grid=(num_cores, inner),
            in_specs=[
                pl.BlockSpec((tile_rows, lane), in_map),
                pl.BlockSpec((tile_rows, lane), in_map),
            ],
            out_specs=pl.BlockSpec((1, 8, lane), lambda c, i: (c, 0, 0)),
            scratch_shapes=[pltpu.VMEM((8, lane), jnp.float32)],
        ),
        compiler_params=pltpu.CompilerParams(
            dimension_semantics=("parallel", "arbitrary"),
        ),
    )(p2, l2)

    # Single tiny cross-lane reduce + mean normalization (plain-JAX glue).
    return jnp.sum(out) / jnp.float32(n)


class LossOnDict:
    """JAX/Pallas equivalent of the PyTorch LossOnDict module."""

    # TODO(synk): the wrapped `loss` is an arbitrary callable in the original
    # module; here the concrete hot-path loss (MSE) is provided as a Pallas
    # kernel and the dict indexing stays as Python glue.
    def __init__(self, key, loss):
        self.key = key
        self.loss = loss

    def __call__(self, pred_dict, label_dict):
        return self.loss(pred_dict[self.key], label_dict[self.key])


if __name__ == "__main__":
    key = jax.random.PRNGKey(0)
    k1, k2, k3, k4 = jax.random.split(key, 4)

    # Case 1: small NCHW f32 tensors, consistent with typical use of the module.
    B, C, H, W = 2, 4, 16, 16
    pred = jax.random.normal(k1, (B, C, H, W), dtype=jnp.float32)
    label = jax.random.normal(k2, (B, C, H, W), dtype=jnp.float32)

    loss_mod = LossOnDict(key="3D", loss=mse_loss_pallas)
    out = loss_mod({"3D": pred}, {"3D": label})
    out = jax.block_until_ready(out)
    ref = jnp.mean((pred - label) ** 2)
    assert jnp.allclose(out, ref, rtol=1e-5, atol=1e-6), (out, ref)

    # Case 2: odd-sized bf16 tensors — exercises the original-dtype streaming,
    # the small tail pad, and the in-kernel mask path.
    pred2 = jax.random.normal(k3, (3, 5, 7, 9), dtype=jnp.bfloat16)
    label2 = jax.random.normal(k4, (3, 5, 7, 9), dtype=jnp.bfloat16)
    out2 = jax.block_until_ready(mse_loss_pallas(pred2, label2))
    ref2 = jnp.mean((pred2.astype(jnp.float32) - label2.astype(jnp.float32)) ** 2)
    assert jnp.allclose(out2, ref2, rtol=1e-4, atol=1e-5), (out2, ref2)

    print("KERNEL_OK")
</pallas_src>

<mosaic_0001>
module attributes {stable_mosaic.version = 11 : i64} {
  func.func @_mse_kernel(%arg0: i32, %arg1: i32, %arg2: memref<16x128xf32, #tpu.memory_space<vmem>>, %arg3: memref<16x128xf32, #tpu.memory_space<vmem>>, %arg4: memref<1x8x128xf32, #tpu.memory_space<vmem>>, %arg5: memref<8x128xf32, #tpu.memory_space<vmem>>) attributes {dimension_semantics = [#tpu.dimension_semantics<parallel>, #tpu.dimension_semantics<arbitrary>], iteration_bounds = array<i64: 2, 1>, scalar_prefetch = 0 : i64, scratch_operands = 1 : i64, tpu.core_type = #tpu.core_type<tc>, window_params = [{transform_indices = @transform_0, window_bounds = array<i64: 16, 128>}, {transform_indices = @transform_1, window_bounds = array<i64: 16, 128>}, {transform_indices = @transform_2, window_bounds = array<i64: 1, 8, 128>}]} {
    %c0_i32 = arith.constant 0 : i32
    %0 = arith.cmpi eq, %arg1, %c0_i32 : i32
    %1 = arith.extui %0 : i1 to i32
    %c0_i32_0 = arith.constant 0 : i32
    %2 = arith.cmpi ne, %1, %c0_i32_0 : i32
    scf.if %2 {
      %cst_14 = arith.constant 0.000000e+00 : f32
      %32 = vector.broadcast %cst_14 : f32 to vector<8x128xf32>
      %c0_15 = arith.constant 0 : index
      %c0_16 = arith.constant 0 : index
      %33 = vector.load %arg5[%c0_15, %c0_16] : memref<8x128xf32, #tpu.memory_space<vmem>>, vector<8x128xf32>
      tpu.vector_store %arg5[%c0_15, %c0_16], %32 {strides = array<i32>} : memref<8x128xf32, #tpu.memory_space<vmem>>, vector<8x128xf32>,
    } else {
    }
    %c0 = arith.constant 0 : index
    %c0_1 = arith.constant 0 : index
    %3 = vector.load %arg2[%c0, %c0_1] : memref<16x128xf32, #tpu.memory_space<vmem>>, vector<16x128xf32>
    %c0_2 = arith.constant 0 : index
    %c0_3 = arith.constant 0 : index
    %4 = vector.load %arg3[%c0_2, %c0_3] : memref<16x128xf32, #tpu.memory_space<vmem>>, vector<16x128xf32>
    %5 = arith.subf %3, %4 : vector<16x128xf32>
    %6 = arith.mulf %5, %5 : vector<16x128xf32>
    %c1_i32 = arith.constant 1 : i32
    %7 = arith.muli %arg0, %c1_i32 : i32
    %8 = arith.addi %7, %arg1 : i32
    %c16_i32 = arith.constant 16 : i32
    %9 = arith.muli %8, %c16_i32 : i32
    %10 = tpu.iota {dimensions = array<i32: 0>} : vector<16x128xi32>
    %11 = vector.broadcast %9 : i32 to vector<16x128xi32>
    %12 = arith.addi %10, %11 : vector<16x128xi32>
    %13 = tpu.iota {dimensions = array<i32: 1>} : vector<16x128xi32>
    %c16_i32_4 = arith.constant 16 : i32
    %14 = vector.broadcast %c16_i32_4 : i32 to vector<16x128xi32>
    %15 = arith.cmpi slt, %12, %14 : vector<16x128xi32>
    %c16_i32_5 = arith.constant 16 : i32
    %16 = vector.broadcast %c16_i32_5 : i32 to vector<16x128xi32>
    %17 = arith.cmpi eq, %12, %16 : vector<16x128xi32>
    %c0_i32_6 = arith.constant 0 : i32
    %18 = vector.broadcast %c0_i32_6 : i32 to vector<16x128xi32>
    %19 = arith.cmpi slt, %13, %18 : vector<16x128xi32>
    %20 = arith.andi %17, %19 : vector<16x128xi1>
    %21 = arith.ori %15, %20 : vector<16x128xi1>
    %cst = arith.constant 0.000000e+00 : f32
    %22 = vector.broadcast %cst : f32 to vector<16x128xf32>
    %23 = arith.select %21, %6, %22 : vector<16x128xi1>, vector<16x128xf32>
    %c0_7 = arith.constant 0 : index
    %c0_8 = arith.constant 0 : index
    %24 = vector.load %arg5[%c0_7, %c0_8] : memref<8x128xf32, #tpu.memory_space<vmem>>, vector<8x128xf32>
    %25 = vector.shape_cast %23 : vector<16x128xf32> to vector<2x8x128xf32>
    %cst_9 = arith.constant dense<0.000000e+00> : vector<8x128xf32>
    %26 = vector.multi_reduction <add>, %25, %cst_9 [0] : vector<2x8x128xf32> to vector<8x128xf32>
    %27 = arith.addf %24, %26 : vector<8x128xf32>
    %c0_10 = arith.constant 0 : index
    %c0_11 = arith.constant 0 : index
    %28 = vector.load %arg5[%c0_10, %c0_11] : memref<8x128xf32, #tpu.memory_space<vmem>>, vector<8x128xf32>
    tpu.vector_store %arg5[%c0_10, %c0_11], %27 {strides = array<i32>} : memref<8x128xf32, #tpu.memory_space<vmem>>, vector<8x128xf32>,
    %c0_i32_12 = arith.constant 0 : i32
    %29 = arith.cmpi eq, %arg1, %c0_i32_12 : i32
    %30 = arith.extui %29 : i1 to i32
    %c0_i32_13 = arith.constant 0 : i32
    %31 = arith.cmpi ne, %30, %c0_i32_13 : i32
    scf.if %31 {
      %c0_14 = arith.constant 0 : index
      %c0_15 = arith.constant 0 : index
      %32 = vector.load %arg5[%c0_14, %c0_15] : memref<8x128xf32, #tpu.memory_space<vmem>>, vector<8x128xf32>
      %33 = vector.shape_cast %32 : vector<8x128xf32> to vector<1x8x128xf32>
      %c0_16 = arith.constant 0 : index
      %c0_17 = arith.constant 0 : index
      %c0_18 = arith.constant 0 : index
      %34 = vector.load %arg4[%c0_16, %c0_17, %c0_18] : memref<1x8x128xf32, #tpu.memory_space<vmem>>, vector<1x8x128xf32>
      tpu.vector_store %arg4[%c0_16, %c0_17, %c0_18], %33 {strides = array<i32>} : memref<1x8x128xf32, #tpu.memory_space<vmem>>, vector<1x8x128xf32>,
    } else {
    }
    return
  }
  func.func @transform_0(%arg0: i32, %arg1: i32) -> (i32, i32) {
    %c1_i32 = arith.constant 1 : i32
    %0 = arith.muli %arg0, %c1_i32 : i32
    %1 = arith.addi %0, %arg1 : i32
    %c0_i32 = arith.constant 0 : i32
    %2 = arith.minsi %1, %c0_i32 : i32
    %c0_i32_0 = arith.constant 0 : i32
    %c0_i32_1 = arith.constant 0 : i32
    return %2, %c0_i32_0 : i32, i32
  }
  func.func @transform_1(%arg0: i32, %arg1: i32) -> (i32, i32) {
    %c1_i32 = arith.constant 1 : i32
    %0 = arith.muli %arg0, %c1_i32 : i32
    %1 = arith.addi %0, %arg1 : i32
    %c0_i32 = arith.constant 0 : i32
    %2 = arith.minsi %1, %c0_i32 : i32
    %c0_i32_0 = arith.constant 0 : i32
    %c0_i32_1 = arith.constant 0 : i32
    return %2, %c0_i32_0 : i32, i32
  }
  func.func @transform_2(%arg0: i32, %arg1: i32) -> (i32, i32, i32) {
    %c0_i32 = arith.constant 0 : i32
    %c0_i32_0 = arith.constant 0 : i32
    %c0_i32_1 = arith.constant 0 : i32
    return %arg0, %c0_i32, %c0_i32_0 : i32, i32, i32
  }
}

</mosaic_0001>

<llo_original>
// kernel: tpu_custom_call.1
$region0: #{tpu_custom_call.1}
  #allocation0 [shape = 'u32[]', space=smem, size = 0x4, offset = 0x4, fixed_abs, tag = 'smem constant byte address 0x4 - core index']
  #allocation1 [shape = 'u32[72,128]{1,0:T(1,128)}', space=vmem, size = 0x9000, scoped, tag = 'internal scratch']
  #allocation2 [shape = 'f32[8,128]{1,0:T(8,128)}', space=vmem, size = 0x1000, scoped, tag = 'scratch operand']
  %s0 = inlined_call_operand.hbm [shape: f32[16,128], index: 0, kind: input, shape index: {}]
  %s1 = inlined_call_operand.hbm [shape: f32[16,128], index: 1, kind: input, shape index: {}]
  %s2 = inlined_call_operand.hbm [shape: f32[2,8,128], index: 2, kind: output, shape index: {}]
  %s3 = sld [smem:[#allocation0]]
  $region57: #{tpu_custom_call.1} parent=0
    _
  %s5 = ssub.s32 1, %s3
  %s6 = scalar_select 0, %s5, %s3
  $region1: #{tpu_custom_call.1} parent=0
    #allocation3 [shape = 'u8[16384]{0}', space=vmem, size = 0x4000, scoped, tag = 'input window, operand 0']
    #allocation4 [shape = 's32[2]{0}', space=sflag, size = 0x8, scoped, tag = 'scoped memory for tpu_custom_call.1']
    #allocation5 [shape = 's32[2]{0}', space=sflag, size = 0x8, scoped, tag = 'scoped memory for tpu_custom_call.1']
    #allocation6 [shape = 'u8[16384]{0}', space=vmem, size = 0x4000, scoped, tag = 'input window, operand 1']
    #allocation7 [shape = 's32[2]{0}', space=sflag, size = 0x8, scoped, tag = 'scoped memory for tpu_custom_call.1']
    #allocation8 [shape = 'u8[8192]{0}', space=vmem, size = 0x2000, scoped, tag = 'output window, operand 0']
    %7 = vsyncpa [#allocation4], 0
    %s8 = scalar_lea.sflag [#allocation4], 1
    %9 = vsyncpa %s8, 0
    %10 = vsyncpa [#allocation7], 0
    %s11 = scalar_lea.sflag [#allocation7], 1
    %12 = vsyncpa %s11, 0
    %13 = vsyncpa [#allocation5], 0
    %s14 = scalar_lea.sflag [#allocation5], 1
    %15 = vsyncpa %s14, 0
    loop: start=0, step=1, limit=4
    $region2: #{tpu_custom_call.1} parent=1 // loop_pre_header
      _
    $region3: #{tpu_custom_call.1} parent=1 // loop_header
      %s17 = sphi 0, %s21
      %p18 = scmp.ge.s32.totalorder %s17, 4
      %s24 = sphi 0, %s36
      %s25 = sphi 0, %s32
      %s26 = sphi 0, %s24
      %s27 = sphi 0, %s25
      %s28 = sphi 0, %s26
      %s29 = sphi 0, %s27
      %s45 = sphi 0, %s47
      %s48 = sphi 0, %s45
      %s49 = sphi 0, %s48
      %s65 = sphi 0, %s49
      %s77 = sphi 0, %s79
      %s80 = sphi 0, %s77
      %s81 = sphi 0, %s80
      %s97 = sphi 0, %s81
      %s103 = sphi 0, %s105
      %s106 = sphi 0, %s103
      %s107 = sphi 0, %s106
      %s123 = sphi 0, %s107
    $region4: #{tpu_custom_call.1} parent=1 // loop_header_branch
      %20 = sbr.rel (%p18) target = $region8
    $region5: #{tpu_custom_call.1} parent=1 // loop_body
      %s22 = ssub.s32 %s17, 1
      %s23 = ssub.s32 %s17, 2
      %s30 = sadd.s32 1, %s25
      %p31 = scmp.ge.s32.totalorder %s30, 1
      %s32 = scalar_select %p31, 0, %s30
      %s33 = sadd.s32 1, %s24
      %s34 = scalar_select %p31, %s33, %s24
      %p35 = scmp.ge.s32.totalorder %s34, 2
      %s36 = scalar_select %p35, 0, %s34
      %s37 = sadd.s32 %s24, %s25
      %p38 = scmp.lt.s32.totalorder %s37, 0
      %s39 = scalar_select %p38, %s37, 0
      %s40 = sadd.s32 %s36, %s32
      %p41 = scmp.lt.s32.totalorder %s40, 0
      %s42 = scalar_select %p41, %s40, 0
      %s43 = ssub.s32 %s39, %s42
      %p44 = scmp.eq.s32.totalorder %s43, 0
      %s46 = sadd.s32 %s45, 1
      %s47 = scalar_select %p44, %s45, %s46
      %p50 = pneg %p44
      %p51 = scmp.eq.s32.totalorder %s17, 1
      %p52 = por %p50, %p51
      %p53 = scmp.ne.s32.totalorder %s45, %s48
      %p54 = scmp.eq.s32.totalorder %s17, 0
      %p55 = por %p53, %p54
      %p56 = scmp.ne.s32.totalorder %s45, %s48
      %p57 = scmp.eq.s32.totalorder %s22, 1
      %p58 = por %p56, %p57
      %p59 = scmp.ne.s32.totalorder %s48, %s49
      %p60 = scmp.eq.s32.totalorder %s22, 0
      %p61 = por %p59, %p60
      %p62 = scmp.ne.s32.totalorder %s48, %s49
      %p63 = scmp.eq.s32.totalorder %s23, 1
      %p64 = por %p62, %p63
      %p66 = scmp.ne.s32.totalorder %s49, %s65
      %p67 = scmp.eq.s32.totalorder %s23, 0
      %p68 = por %p66, %p67
      %s69 = sadd.s32 %s24, %s25
      %p70 = scmp.lt.s32.totalorder %s69, 0
      %s71 = scalar_select %p70, %s69, 0
      %s72 = sadd.s32 %s36, %s32
      %p73 = scmp.lt.s32.totalorder %s72, 0
      %s74 = scalar_select %p73, %s72, 0
      %s75 = ssub.s32 %s71, %s74
      %p76 = scmp.eq.s32.totalorder %s75, 0
      %s78 = sadd.s32 %s77, 1
      %s79 = scalar_select %p76, %s77, %s78
      %p82 = pneg %p76
      %p83 = scmp.eq.s32.totalorder %s17, 1
      %p84 = por %p82, %p83
      %p85 = scmp.ne.s32.totalorder %s77, %s80
      %p86 = scmp.eq.s32.totalorder %s17, 0
      %p87 = por %p85, %p86
      %p88 = scmp.ne.s32.totalorder %s77, %s80
      %p89 = scmp.eq.s32.totalorder %s22, 1
      %p90 = por %p88, %p89
      %p91 = scmp.ne.s32.totalorder %s80, %s81
      %p92 = scmp.eq.s32.totalorder %s22, 0
      %p93 = por %p91, %p92
      %p94 = scmp.ne.s32.totalorder %s80, %s81
      %p95 = scmp.eq.s32.totalorder %s23, 1
      %p96 = por %p94, %p95
      %p98 = scmp.ne.s32.totalorder %s81, %s97
      %p99 = scmp.eq.s32.totalorder %s23, 0
      %p100 = por %p98, %p99
      %s101 = ssub.s32 %s24, %s36
      %p102 = scmp.eq.s32.totalorder %s101, 0
      %s104 = sadd.s32 %s103, 1
      %s105 = scalar_select %p102, %s103, %s104
      %p108 = pneg %p102
      %p109 = scmp.eq.s32.totalorder %s17, 1
      %p110 = por %p108, %p109
      %p111 = scmp.ne.s32.totalorder %s103, %s106
      %p112 = scmp.eq.s32.totalorder %s17, 0
      %p113 = por %p111, %p112
      %p114 = scmp.ne.s32.totalorder %s103, %s106
      %p115 = scmp.eq.s32.totalorder %s22, 1
      %p116 = por %p114, %p115
      %p117 = scmp.ne.s32.totalorder %s106, %s107
      %p118 = scmp.eq.s32.totalorder %s22, 0
      %p119 = por %p117, %p118
      %p120 = scmp.ne.s32.totalorder %s106, %s107
      %p121 = scmp.eq.s32.totalorder %s23, 1
      %p122 = por %p120, %p121
      %p124 = scmp.ne.s32.totalorder %s107, %s123
      %p125 = scmp.eq.s32.totalorder %s23, 0
      %p126 = por %p124, %p125
      %p127 = scmp.le.s32.totalorder 1, %s17
      %p128 = scmp.lt.s32.totalorder %s17, 3
      %p129 = pnand %p127, %p128
      %p130 = pneg %p129
      // Predicated region
      $region9: #{tpu_custom_call.1} parent=5 // pred_check
        _
      $region10: #{tpu_custom_call.1} parent=5 // pred_check_branch
        %132 = sbr.rel (%p129) target = $region12
      $region11: #{tpu_custom_call.1} parent=5 // pred_region
        %s133 = ssub.s32 %s17, 1
      $region12: #{tpu_custom_call.1} parent=5 // pred_fallthru
        _
      %p134 = scmp.lt.s32.totalorder %s17, 2
      // Predicated region
      $region13: #{tpu_custom_call.1} parent=5 // pred_check
        %p135 = pneg %p134
      $region14: #{tpu_custom_call.1} parent=5 // pred_check_branch
        %137 = sbr.rel (%p135) target = $region16
      $region15: #{tpu_custom_call.1} parent=5 // pred_region
        // Predicated region
        $region17: #{tpu_custom_call.1} parent=15 // pred_check
          %p138 = pneg %p55
        $region18: #{tpu_custom_call.1} parent=15 // pred_check_branch
          %140 = sbr.rel (%p138) target = $region20
        $region19: #{tpu_custom_call.1} parent=15 // pred_region
          %s141 = sand.u32 %s45, 1
          %s142 = scalar_lea.sflag [#allocation4], %s141
          %s143 = sand.u32 %s45, 1
          %s144 = smul.addr %s143, 16
          %s145 = scalar_lea.vmem [#allocation3], %s144
          %s146 = sadd.s32 %s24, %s25
          %p147 = scmp.lt.s32.totalorder %s146, 0
          %s148 = scalar_select %p147, %s146, 0
          %s149 = smul.u32 2, %s148
          %151 = vsyncadd %s142, 0
          %s152 = smul.addr %s149, 8
          %s153 = scalar_lea.hbm %s0, %s152
          %s154 = sshll.u32 %s153, 4
          %s155 = int_to_ptr.hbm [resolvable:$true] %s154
          %s156 = sshll.u32 %s145, 4
          %s157 = int_to_ptr.vmem [resolvable:$true] %s156
          %162 = dma.hbm_to_vmem [thread:$0]  %s155, 256, %s157, %s142, 128, 128, 8
        $region20: #{tpu_custom_call.1} parent=15 // pred_fallthru
          _
        // Predicated region
        $region21: #{tpu_custom_call.1} parent=15 // pred_check
          %p163 = pneg %p87
        $region22: #{tpu_custom_call.1} parent=15 // pred_check_branch
          %165 = sbr.rel (%p163) target = $region24
        $region23: #{tpu_custom_call.1} parent=15 // pred_region
          %s166 = sand.u32 %s77, 1
          %s167 = scalar_lea.sflag [#allocation7], %s166
          %s168 = sand.u32 %s77, 1
          %s169 = smul.addr %s168, 16
          %s170 = scalar_lea.vmem [#allocation6], %s169
          %s171 = sadd.s32 %s24, %s25
          %p172 = scmp.lt.s32.totalorder %s171, 0
          %s173 = scalar_select %p172, %s171, 0
          %s174 = smul.u32 2, %s173
          %176 = vsyncadd %s167, 0
          %s177 = smul.addr %s174, 8
          %s178 = scalar_lea.hbm %s1, %s177
          %s179 = sshll.u32 %s178, 4
          %s180 = int_to_ptr.hbm [resolvable:$true] %s179
          %s181 = sshll.u32 %s170, 4
          %s182 = int_to_ptr.vmem [resolvable:$true] %s181
          %187 = dma.hbm_to_vmem [thread:$0]  %s180, 256, %s182, %s167, 128, 128, 8
        $region24: #{tpu_custom_call.1} parent=15 // pred_fallthru
          _
      $region16: #{tpu_custom_call.1} parent=5 // pred_fallthru
        _
      %p188 = scmp.le.s32.totalorder 1, %s17
      %p189 = scmp.lt.s32.totalorder %s17, 3
      %p190 = pnand %p188, %p189
      %p191 = pneg %p190
      // Predicated region
      $region25: #{tpu_custom_call.1} parent=5 // pred_check
        _
      $region26: #{tpu_custom_call.1} parent=5 // pred_check_branch
        %193 = sbr.rel (%p190) target = $region28
      $region27: #{tpu_custom_call.1} parent=5 // pred_region
        %s194 = ssub.s32 %s17, 1
        %s195 = sand.u32 %s48, 1
        %s196 = scalar_lea.sflag [#allocation4], %s195
        %s197 = sand.u32 %s48, 1
        %s198 = smul.addr %s197, 16
        %s199 = scalar_lea.vmem [#allocation3], %s198
        // Predicated region
        $region29: #{tpu_custom_call.1} parent=27 // pred_check
          %p200 = pneg %p61
        $region30: #{tpu_custom_call.1} parent=27 // pred_check_branch
          %202 = sbr.rel (%p200) target = $region32
        $region31: #{tpu_custom_call.1} parent=27 // pred_region
          %204 = dma.done %s196, 256
        $region32: #{tpu_custom_call.1} parent=27 // pred_fallthru
          _
        %s205 = sand.u32 %s80, 1
        %s206 = scalar_lea.sflag [#allocation7], %s205
        %s207 = sand.u32 %s80, 1
        %s208 = smul.addr %s207, 16
        %s209 = scalar_lea.vmem [#allocation6], %s208
        // Predicated region
        $region33: #{tpu_custom_call.1} parent=27 // pred_check
          %p210 = pneg %p93
        $region34: #{tpu_custom_call.1} parent=27 // pred_check_branch
          %212 = sbr.rel (%p210) target = $region36
        $region35: #{tpu_custom_call.1} parent=27 // pred_region
          %214 = dma.done %s206, 256
        $region36: #{tpu_custom_call.1} parent=27 // pred_fallthru
          _
        %s215 = sand.u32 %s48, 1
        %s216 = scalar_lea.sflag [#allocation4], %s215
        %s217 = sand.u32 %s48, 1
        %s218 = smul.addr %s217, 16
        %s219 = scalar_lea.vmem [#allocation3], %s218
        %p220 = pneg %p61
        %p221 = pneg %p58
        %s222 = sand.u32 %s80, 1
        %s223 = scalar_lea.sflag [#allocation7], %s222
        %s224 = sand.u32 %s80, 1
        %s225 = smul.addr %s224, 16
        %s226 = scalar_lea.vmem [#allocation6], %s225
        %p227 = pneg %p93
        %p228 = pneg %p90
        %p229 = pneg %p119
        %p230 = pneg %p116
        %s231 = sand.u32 %s106, 1
        %s232 = scalar_lea.sflag [#allocation5], %s231
        %s233 = sand.u32 %s106, 1
        %s234 = smul.addr %s233, 8
        %s235 = scalar_lea.vmem [#allocation8], %s234
        %s236 = sadd.s32 %s26, %s27
        %p237 = scmp.lt.s32.totalorder %s236, 0
        %s238 = scalar_select %p237, %s236, 0
        %s239 = smul.u32 2, %s238
        %s240 = sadd.s32 %s26, %s27
        %p241 = scmp.lt.s32.totalorder %s240, 0
        %s242 = scalar_select %p241, %s240, 0
        %s243 = smul.u32 2, %s242
        %p244 = scmp.eq.s32.totalorder %s27, 0
        // Predicated region
        $region37: #{tpu_custom_call.1} parent=27 // pred_check
          %p245 = pneg %p244
        $region38: #{tpu_custom_call.1} parent=27 // pred_check_branch
          %247 = sbr.rel (%p245) target = $region40
        $region39: #{tpu_custom_call.1} parent=27 // pred_region
          %248 = vst [vmem:[#allocation2] sm:$0xff] 0.0
        $region40: #{tpu_custom_call.1} parent=27 // pred_fallthru
          _
        %v249 = vld [vmem:[%s199] sm:$0xff]
        %v250 = vld [vmem:[%s199 + $0x8] sm:$0xff]
        %v251 = vld [vmem:[%s209] sm:$0xff]
        %v252 = vld [vmem:[%s209 + $0x8] sm:$0xff]
        %v253 = vsub.f32 %v249, %v251
        %v254 = vsub.f32 %v250, %v252
        %v255 = vmul.f32 %v253, %v253
        %v256 = vmul.f32 %v254, %v254
        %s257 = sadd.s32 %s26, %s27
        %s258 = smul.u32 %s257, 16
        %v259 = vlaneseq
        %v260 = vshrl.u32 %v259, 7
        %v261 = vadd.s32 %v260, 8
        %v262 = vstv %s258
        %v263 = vadd.s32 %v260, %v262
        %v264 = vadd.s32 %v261, %v262
        %v265 = vlaneseq
        %v266 = vand.u32 %v265, 127
        %vm267 = vcmp.lt.s32.totalorder %v263, 16
        %vm268 = vcmp.lt.s32.totalorder %v264, 16
        %vm269 = vcmp.eq.s32.totalorder %v263, 16
        %vm270 = vcmp.eq.s32.totalorder %v264, 16
        %vm271 = vcmp.lt.s32.totalorder %v266, 0
        %vm272 = vmand %vm269, %vm271
        %vm273 = vmand %vm270, %vm271
        %vm274 = vmor %vm267, %vm272
        %vm275 = vmor %vm268, %vm273
        %v276 = vsel %vm274, %v255, 0.0
        %v277 = vsel %vm275, %v256, 0.0
        %v278 = vld [vmem:[#allocation2] sm:$0xff]
        %v279 = vadd.f32 %v276, %v277
        %v280 = vadd.f32 %v278, %v279
        %281 = vst [vmem:[#allocation2] sm:$0xff] %v280
        // Predicated region
        $region41: #{tpu_custom_call.1} parent=27 // pred_check
          %p282 = pneg %p244
        $region42: #{tpu_custom_call.1} parent=27 // pred_check_branch
          %284 = sbr.rel (%p282) target = $region44
        $region43: #{tpu_custom_call.1} parent=27 // pred_region
          %v285 = vld [vmem:[#allocation2] sm:$0xff]
          %286 = vst [vmem:[%s235] sm:$0xff] %v285
        $region44: #{tpu_custom_call.1} parent=27 // pred_fallthru
          _
        %s287 = sand.u32 %s106, 1
        %s288 = scalar_lea.sflag [#allocation5], %s287
        %s289 = sand.u32 %s106, 1
        %s290 = smul.addr %s289, 8
        %s291 = scalar_lea.vmem [#allocation8], %s290
        // Predicated region
        $region45: #{tpu_custom_call.1} parent=27 // pred_check
          %p292 = pneg %p116
        $region46: #{tpu_custom_call.1} parent=27 // pred_check_branch
          %294 = sbr.rel (%p292) target = $region48
        $region47: #{tpu_custom_call.1} parent=27 // pred_region
          %296 = vsyncadd %s288, 0
          %s297 = smul.addr %s26, 8
          %s298 = scalar_lea.hbm %s2, %s297
          %s300 = sshll.u32 %s291, 4
          %s301 = int_to_ptr.vmem [resolvable:$true] %s300
          %s302 = sshll.u32 %s298, 4
          %s303 = int_to_ptr.hbm [resolvable:$true] %s302
          %305 = dma.vmem_to_hbm [thread:$0]  %s301, 128, %s303, %s288
        $region48: #{tpu_custom_call.1} parent=27 // pred_fallthru
          _
      $region28: #{tpu_custom_call.1} parent=5 // pred_fallthru
        _
      %p306 = scmp.le.s32.totalorder 2, %s17
      // Predicated region
      $region49: #{tpu_custom_call.1} parent=5 // pred_check
        %p307 = pneg %p306
      $region50: #{tpu_custom_call.1} parent=5 // pred_check_branch
        %309 = sbr.rel (%p307) target = $region52
      $region51: #{tpu_custom_call.1} parent=5 // pred_region
        %s310 = ssub.s32 %s17, 2
        // Predicated region
        $region53: #{tpu_custom_call.1} parent=51 // pred_check
          %p311 = pneg %p122
        $region54: #{tpu_custom_call.1} parent=51 // pred_check_branch
          %313 = sbr.rel (%p311) target = $region56
        $region55: #{tpu_custom_call.1} parent=51 // pred_region
          %s314 = sand.u32 %s107, 1
          %s315 = scalar_lea.sflag [#allocation5], %s314
          %s316 = sand.u32 %s107, 1
          %s317 = smul.addr %s316, 8
          %s318 = scalar_lea.vmem [#allocation8], %s317
          %320 = dma.done %s315, 128
        $region56: #{tpu_custom_call.1} parent=51 // pred_fallthru
          _
      $region52: #{tpu_custom_call.1} parent=5 // pred_fallthru
        _
    $region6: #{tpu_custom_call.1} parent=1 // loop_footer
      %s21 = sadd.s32 1, %s17
    $region7: #{tpu_custom_call.1} parent=1 // loop_footer_branch
      %16 = sbr.rel target = $region3
    $region8: #{tpu_custom_call.1} parent=1 // loop_exit
      _
    %321 = vsyncpa [#allocation4], 1
    %s322 = scalar_lea.sflag [#allocation4], 1
    %323 = vsyncpa %s322, 1
    %324 = vsyncpa [#allocation7], 1
    %s325 = scalar_lea.sflag [#allocation7], 1
    %326 = vsyncpa %s325, 1
    %327 = vsyncpa [#allocation5], 1
    %s328 = scalar_lea.sflag [#allocation5], 1
    %329 = vsyncpa %s328, 1

</llo_original>
